<compile_context>
chip_gen: v7x
topology: tpu7x:2x2x1
jax: 0.10.0
libtpu: 0.0.40
codegen_flags: <defaults>
</compile_context>

<pallas_src>
import math

import jax
import jax.numpy as jnp
from jax.experimental import pallas as pl
from jax.experimental.pallas import tpu as pltpu


def _round_up(x: int, m: int) -> int:
    return ((x + m - 1) // m) * m


# ----------------------------------------------------------------------------
# Kernels
# ----------------------------------------------------------------------------

def _rnn_step_kernel(xh_ref, w_ref, b_ref, h_out_ref):
    """Single step: h = tanh([x, h_prev] @ W_cat + b). All blocks whole-array."""
    pre = jnp.dot(xh_ref[...], w_ref[...], preferred_element_type=jnp.float32)
    h_out_ref[...] = jnp.tanh(pre + b_ref[...]).astype(h_out_ref.dtype)


def _rnn_seq_kernel(h0_ref, x_ref, w_ref, b_ref, hseq_ref, h_scr, xh_scr):
    """Fused sequence: grid axis = time step (sequential / "arbitrary").

    h0_ref  : (Bp, Hp)        constant block (read once at t == 0)
    x_ref   : (1, Bp, Ip)     per-step block of the (T, Bp, Ip) input
    w_ref   : (Ip+Hp, Hp)     constant block (resident weights)
    b_ref   : (Bp, Hp)        constant block (pre-broadcast bias)
    hseq_ref: (1, Bp, Hp)     per-step output block
    h_scr   : (Bp, Hp)        VMEM scratch -- recurrent state, stays on-chip
    xh_scr  : (Bp, Ip+Hp)     VMEM scratch -- staging for the concatenated matmul
    """
    ip = x_ref.shape[-1]  # static padded input width (multiple of 128)

    @pl.when(pl.program_id(0) == 0)
    def _():
        h_scr[...] = h0_ref[...]

    # Stage [x_t, h_{t-1}] into one lane-aligned block, single deep-K matmul.
    xh_scr[:, :ip] = x_ref[0]
    xh_scr[:, ip:] = h_scr[...]
    pre = jnp.dot(xh_scr[...], w_ref[...], preferred_element_type=jnp.float32)
    h_new = jnp.tanh(pre + b_ref[...])

    h_scr[...] = h_new                              # recurrence stays in VMEM
    hseq_ref[0] = h_new.astype(hseq_ref.dtype)      # lane-dense per-step store


# ----------------------------------------------------------------------------
# Wrappers
# ----------------------------------------------------------------------------

def rnn_cell_forward(x, h_prev, w_cat_pad, b_pad, dims):
    """One RNN step. x:[B,I], h_prev:[B,H]. Returns h:[B,H]."""
    I, H, Ip, Hp = dims
    B = x.shape[0]
    Bp = _round_up(B, 8)

    # Pad + concatenate [x, h_prev] in the wrapper (h_prev is given here, so
    # no in-kernel concat needed for the single-step path).
    xh = jnp.zeros((Bp, Ip + Hp), jnp.float32)
    xh = xh.at[:B, :I].set(x.astype(jnp.float32))
    xh = xh.at[:B, Ip:Ip + H].set(h_prev.astype(jnp.float32))
    b_bcast = jnp.broadcast_to(b_pad, (Bp, Hp))

    h_pad = pl.pallas_call(
        _rnn_step_kernel,
        out_shape=jax.ShapeDtypeStruct((Bp, Hp), jnp.float32),
    )(xh, w_cat_pad, b_bcast)
    return h_pad[:B, :H]


def rnn_sequence_forward(x_seq, h0, w_cat_pad, b_pad, dims):
    """Fused multi-step RNN. x_seq:[T,B,I], h0:[B,H]. Returns hseq:[T,B,H]."""
    I, H, Ip, Hp = dims
    T, B, _ = x_seq.shape
    Bp = _round_up(B, 8)

    x_pad = jnp.zeros((T, Bp, Ip), jnp.float32)
    x_pad = x_pad.at[:, :B, :I].set(x_seq.astype(jnp.float32))
    h0_pad = jnp.zeros((Bp, Hp), jnp.float32)
    h0_pad = h0_pad.at[:B, :H].set(h0.astype(jnp.float32))
    b_bcast = jnp.broadcast_to(b_pad, (Bp, Hp))   # broadcast once, outside loop

    hseq_pad = pl.pallas_call(
        _rnn_seq_kernel,
        grid=(T,),
        in_specs=[
            pl.BlockSpec((Bp, Hp), lambda t: (0, 0)),          # h0 (resident)
            pl.BlockSpec((1, Bp, Ip), lambda t: (t, 0, 0)),    # x_t (streamed)
            pl.BlockSpec((Ip + Hp, Hp), lambda t: (0, 0)),     # W_cat (resident)
            pl.BlockSpec((Bp, Hp), lambda t: (0, 0)),          # bias (resident)
        ],
        out_specs=pl.BlockSpec((1, Bp, Hp), lambda t: (t, 0, 0)),
        out_shape=jax.ShapeDtypeStruct((T, Bp, Hp), jnp.float32),
        scratch_shapes=[
            pltpu.VMEM((Bp, Hp), jnp.float32),        # recurrent h carry
            pltpu.VMEM((Bp, Ip + Hp), jnp.float32),   # [x_t, h] staging block
        ],
        compiler_params=pltpu.CompilerParams(
            dimension_semantics=("arbitrary",)),      # time is sequential
    )(h0_pad, x_pad, w_cat_pad, b_bcast)
    return hseq_pad[:, :B, :H]


# ----------------------------------------------------------------------------
# Module
# ----------------------------------------------------------------------------

class BaseRNNLayerPallas:
    """JAX/Pallas port of BaseRNNLayer with a vanilla tanh-RNN forward.

    # TODO(synk): the PyTorch base class leaves forward() abstract; the vanilla
    # tanh RNN cell is implemented here as the canonical concrete semantics.
    """

    def __init__(self, input_features: int, hidden_features: int, key):
        assert input_features > 0
        assert hidden_features > 0
        self.input_features = input_features
        self.hidden_features = hidden_features

        stdv = 1.0 / math.sqrt(hidden_features)
        k1, k2, k3, k4 = jax.random.split(key, 4)
        # PyTorch stores weight_ih as [H, I]; we keep the transpose [I, H].
        self.w_ih = jax.random.uniform(
            k1, (input_features, hidden_features), jnp.float32, -stdv, stdv)
        self.w_hh = jax.random.uniform(
            k2, (hidden_features, hidden_features), jnp.float32, -stdv, stdv)
        b_ih = jax.random.uniform(
            k3, (hidden_features,), jnp.float32, -stdv, stdv)
        b_hh = jax.random.uniform(
            k4, (hidden_features,), jnp.float32, -stdv, stdv)
        self.b = (b_ih + b_hh).reshape(1, hidden_features)

        # Lane-aligned, concatenated parameters (built once).
        I, H = input_features, hidden_features
        Ip, Hp = _round_up(I, 128), _round_up(H, 128)
        self._dims = (I, H, Ip, Hp)
        w_cat = jnp.zeros((Ip + Hp, Hp), jnp.float32)
        w_cat = w_cat.at[:I, :H].set(self.w_ih)            # rows for x
        w_cat = w_cat.at[Ip:Ip + H, :H].set(self.w_hh)     # rows for h_prev
        self.w_cat_pad = w_cat
        self.b_pad = jnp.zeros((1, Hp), jnp.float32).at[:, :H].set(self.b)

    def forward(self, x, h_prev, s_prev=None):
        """Single step: x:[B,I], h_prev:[B,H] -> (h:[B,H], None)."""
        h = rnn_cell_forward(x, h_prev, self.w_cat_pad, self.b_pad, self._dims)
        return h, None  # vanilla RNN: no cell state

    def forward_sequence(self, x_seq, h0):
        """Fused T-step forward: x_seq:[T,B,I], h0:[B,H] -> (h_seq:[T,B,H], h_T)."""
        hseq = rnn_sequence_forward(
            x_seq, h0, self.w_cat_pad, self.b_pad, self._dims)
        return hseq, hseq[-1]


# ----------------------------------------------------------------------------
# Pure-JAX references
# ----------------------------------------------------------------------------

def _reference_step(layer, x, h_prev):
    return jnp.tanh(x @ layer.w_ih + h_prev @ layer.w_hh + layer.b)


def _reference_sequence(layer, x_seq, h0):
    hs, h = [], h0
    for t in range(x_seq.shape[0]):
        h = _reference_step(layer, x_seq[t], h)
        hs.append(h)
    return jnp.stack(hs)


if __name__ == "__main__":
    B, I, H, T = 8, 16, 32, 8   # batch, input_features, hidden_features, seq len

    key = jax.random.PRNGKey(0)
    k_param, k_x, k_h, k_seq = jax.random.split(key, 4)

    layer = BaseRNNLayerPallas(I, H, k_param)
    x = jax.random.normal(k_x, (B, I), jnp.float32)
    h_prev = jax.random.normal(k_h, (B, H), jnp.float32)
    x_seq = jax.random.normal(k_seq, (T, B, I), jnp.float32)

    # --- single step (module contract) ---
    h, s = layer.forward(x, h_prev)
    h = jax.block_until_ready(h)
    ref_h = _reference_step(layer, x, h_prev)
    assert h.shape == (B, H)
    assert s is None
    assert jnp.allclose(h, ref_h, atol=1e-4, rtol=1e-4)

    # --- fused sequence (time loop inside one pallas_call) ---
    hseq, h_last = layer.forward_sequence(x_seq, h_prev)
    hseq = jax.block_until_ready(hseq)
    ref_seq = _reference_sequence(layer, x_seq, h_prev)
    assert hseq.shape == (T, B, H)
    assert jnp.allclose(hseq, ref_seq, atol=1e-4, rtol=1e-4)
    assert jnp.allclose(h_last, ref_seq[-1], atol=1e-4, rtol=1e-4)

    print("KERNEL_OK")
</pallas_src>

<mosaic_0001>
module attributes {stable_mosaic.version = 11 : i64} {
  func.func @_rnn_step_kernel(%arg0: memref<8x256xf32, #tpu.memory_space<vmem>>, %arg1: memref<256x128xf32, #tpu.memory_space<vmem>>, %arg2: memref<8x128xf32, #tpu.memory_space<vmem>>, %arg3: memref<8x128xf32, #tpu.memory_space<vmem>>) attributes {dimension_semantics = [], scalar_prefetch = 0 : i64, scratch_operands = 0 : i64, tpu.core_type = #tpu.core_type<tc>} {
    %c0 = arith.constant 0 : index
    %c0_0 = arith.constant 0 : index
    %0 = vector.load %arg0[%c0, %c0_0] : memref<8x256xf32, #tpu.memory_space<vmem>>, vector<8x256xf32>
    %c0_1 = arith.constant 0 : index
    %c0_2 = arith.constant 0 : index
    %1 = vector.load %arg1[%c0_1, %c0_2] : memref<256x128xf32, #tpu.memory_space<vmem>>, vector<256x128xf32>
    %cst = arith.constant dense<0.000000e+00> : vector<8x128xf32>
    %2 = tpu.matmul %0, %1, %cst {dimension_numbers = #tpu.dot_dimension_numbers<[1], [0], [0], [1], [0, 0, 1, 1], [], []>} : vector<8x256xf32>, vector<256x128xf32>, vector<8x128xf32> -> vector<8x128xf32>
    %c0_3 = arith.constant 0 : index
    %c0_4 = arith.constant 0 : index
    %3 = vector.load %arg2[%c0_3, %c0_4] : memref<8x128xf32, #tpu.memory_space<vmem>>, vector<8x128xf32>
    %4 = arith.addf %2, %3 : vector<8x128xf32>
    %5 = math.tanh %4 : vector<8x128xf32>
    %c0_5 = arith.constant 0 : index
    %c0_6 = arith.constant 0 : index
    %6 = vector.load %arg3[%c0_5, %c0_6] : memref<8x128xf32, #tpu.memory_space<vmem>>, vector<8x128xf32>
    tpu.vector_store %arg3[%c0_5, %c0_6], %5 {strides = array<i32>} : memref<8x128xf32, #tpu.memory_space<vmem>>, vector<8x128xf32>,
    return
  }
}

</mosaic_0001>

<llo_original>
// kernel: tpu_custom_call.1
$region0: #{tpu_custom_call.1}
  #allocation0 [shape = 'u32[]', space=smem, size = 0x4, offset = 0x4, fixed_abs, tag = 'smem constant byte address 0x4 - core index']
  #allocation1 [shape = 'u32[144,128]{1,0:T(1,128)}', space=vmem, size = 0x12000, scoped, tag = 'internal scratch']
  %s0 = inlined_call_operand.hbm [shape: f32[8,256], index: 0, kind: input, shape index: {}]
  %s1 = inlined_call_operand.hbm [shape: f32[256,128], index: 1, kind: input, shape index: {}]
  %s2 = inlined_call_operand.hbm [shape: f32[8,128], index: 2, kind: input, shape index: {}]
  %s3 = inlined_call_operand.hbm [shape: f32[8,128], index: 3, kind: output, shape index: {}]
  %s4 = sld [smem:[#allocation0]]
  $region34: #{tpu_custom_call.1} parent=0
    _
  %s6 = ssub.s32 1, %s4
  %s7 = scalar_select 0, %s6, %s4
  $region1: #{tpu_custom_call.1} parent=0
    #allocation2 [shape = 'u8[8192]{0}', space=vmem, size = 0x2000, scoped, tag = 'input window, operand 0, single buffered']
    #allocation3 [shape = 's32[1]{0}', space=sflag, size = 0x4, scoped, tag = 'scoped memory for tpu_custom_call.1']
    #allocation4 [shape = 's32[1]{0}', space=sflag, size = 0x4, scoped, tag = 'scoped memory for tpu_custom_call.1']
    #allocation5 [shape = 'u8[131072]{0}', space=vmem, size = 0x20000, scoped, tag = 'input window, operand 1, single buffered']
    #allocation6 [shape = 's32[1]{0}', space=sflag, size = 0x4, scoped, tag = 'scoped memory for tpu_custom_call.1']
    #allocation7 [shape = 'u8[4096]{0}', space=vmem, size = 0x1000, scoped, tag = 'input window, operand 2, single buffered']
    #allocation8 [shape = 'u8[4096]{0}', space=vmem, size = 0x1000, scoped, tag = 'output window, operand 0, single buffered']
    %8 = vsyncpa [#allocation3], 0
    %9 = vsyncpa [#allocation6], 0
    %10 = vsyncpa [#allocation4], 0
    // Predicated region
    $region2: #{tpu_custom_call.1} parent=1 // pred_check
      _
    $region3: #{tpu_custom_call.1} parent=1 // pred_check_branch
      %12 = sbr.rel (0) target = $region5
    $region4: #{tpu_custom_call.1} parent=1 // pred_region
      %s14 = ssub.s32 256, 256
      %15 = vsyncadd [#allocation3], %s14
      %s17 = sshll.u32 [#allocation2], 4
      %s18 = int_to_ptr.vmem [resolvable:$true] %s17
      %20 = dma.hbm_to_vmem [thread:$0]  %s0, 256, %s18, [#allocation3]
    $region5: #{tpu_custom_call.1} parent=1 // pred_fallthru
      _
    // Predicated region
    $region6: #{tpu_custom_call.1} parent=1 // pred_check
      _
    $region7: #{tpu_custom_call.1} parent=1 // pred_check_branch
      %22 = sbr.rel (0) target = $region9
    $region8: #{tpu_custom_call.1} parent=1 // pred_region
      %s24 = ssub.s32 4096, 4096
      %25 = vsyncadd [#allocation6], %s24
      %s26 = sshll.u32 [#allocation5], 4
      %s27 = int_to_ptr.vmem [resolvable:$true] %s26
      %32 = dma.hbm_to_vmem [thread:$0]  %s1, 4096, %s27, [#allocation6], 128, 128, 8
    $region9: #{tpu_custom_call.1} parent=1 // pred_fallthru
      _
    // Predicated region
    $region10: #{tpu_custom_call.1} parent=1 // pred_check
      _
    $region11: #{tpu_custom_call.1} parent=1 // pred_check_branch
      %34 = sbr.rel (0) target = $region13
    $region12: #{tpu_custom_call.1} parent=1 // pred_region
      %s36 = ssub.s32 128, 128
      %37 = vsyncadd [#allocation6], %s36
      %s39 = sshll.u32 [#allocation7], 4
      %s40 = int_to_ptr.vmem [resolvable:$true] %s39
      %42 = dma.hbm_to_vmem [thread:$0]  %s2, 128, %s40, [#allocation6]
    $region13: #{tpu_custom_call.1} parent=1 // pred_fallthru
      _
    // Predicated region
    $region14: #{tpu_custom_call.1} parent=1 // pred_check
      _
    $region15: #{tpu_custom_call.1} parent=1 // pred_check_branch
      %44 = sbr.rel (0) target = $region17
    $region16: #{tpu_custom_call.1} parent=1 // pred_region
      %45 = dma.done [#allocation3], 256
    $region17: #{tpu_custom_call.1} parent=1 // pred_fallthru
      _
    // Predicated region
    $region18: #{tpu_custom_call.1} parent=1 // pred_check
      _
    $region19: #{tpu_custom_call.1} parent=1 // pred_check_branch
      %47 = sbr.rel (0) target = $region21
    $region20: #{tpu_custom_call.1} parent=1 // pred_region
      %48 = dma.done [#allocation6], 4096
    $region21: #{tpu_custom_call.1} parent=1 // pred_fallthru
      _
    // Predicated region
    $region22: #{tpu_custom_call.1} parent=1 // pred_check
      _
    $region23: #{tpu_custom_call.1} parent=1 // pred_check_branch
      %50 = sbr.rel (0) target = $region25
    $region24: #{tpu_custom_call.1} parent=1 // pred_region
      %51 = dma.done [#allocation6], 128
    $region25: #{tpu_custom_call.1} parent=1 // pred_fallthru
      _
    %v52 = vld [vmem:[#allocation2] sm:$0xff]
    %v53 = vld [vmem:[#allocation2 + $0x8] sm:$0xff]
    %v54 = vld [vmem:[#allocation5] sm:$0xff]
    %v55 = vld [vmem:[#allocation5 + $0x8] sm:$0xff]
    %v56 = vld [vmem:[#allocation5 + $0x10] sm:$0xff]
    %v57 = vld [vmem:[#allocation5 + $0x18] sm:$0xff]
    %v58 = vld [vmem:[#allocation5 + $0x20] sm:$0xff]
    %v59 = vld [vmem:[#allocation5 + $0x28] sm:$0xff]
    %v60 = vld [vmem:[#allocation5 + $0x30] sm:$0xff]
    %v61 = vld [vmem:[#allocation5 + $0x38] sm:$0xff]
    %v62 = vld [vmem:[#allocation5 + $0x40] sm:$0xff]
    %v63 = vld [vmem:[#allocation5 + $0x48] sm:$0xff]
    %v64 = vld [vmem:[#allocation5 + $0x50] sm:$0xff]
    %v65 = vld [vmem:[#allocation5 + $0x58] sm:$0xff]
    %v66 = vld [vmem:[#allocation5 + $0x60] sm:$0xff]
    %v67 = vld [vmem:[#allocation5 + $0x68] sm:$0xff]
    %v68 = vld [vmem:[#allocation5 + $0x70] sm:$0xff]
    %v69 = vld [vmem:[#allocation5 + $0x78] sm:$0xff]
    %v70 = vld [vmem:[#allocation5 + $0x80] sm:$0xff]
    %v71 = vld [vmem:[#allocation5 + $0x88] sm:$0xff]
    %v72 = vld [vmem:[#allocation5 + $0x90] sm:$0xff]
    %v73 = vld [vmem:[#allocation5 + $0x98] sm:$0xff]
    %v74 = vld [vmem:[#allocation5 + $0xa0] sm:$0xff]
    %v75 = vld [vmem:[#allocation5 + $0xa8] sm:$0xff]
    %v76 = vld [vmem:[#allocation5 + $0xb0] sm:$0xff]
    %v77 = vld [vmem:[#allocation5 + $0xb8] sm:$0xff]
    %v78 = vld [vmem:[#allocation5 + $0xc0] sm:$0xff]
    %v79 = vld [vmem:[#allocation5 + $0xc8] sm:$0xff]
    %v80 = vld [vmem:[#allocation5 + $0xd0] sm:$0xff]
    %v81 = vld [vmem:[#allocation5 + $0xd8] sm:$0xff]
    %v82 = vld [vmem:[#allocation5 + $0xe0] sm:$0xff]
    %v83 = vld [vmem:[#allocation5 + $0xe8] sm:$0xff]
    %v84 = vld [vmem:[#allocation5 + $0xf0] sm:$0xff]
    %v85 = vld [vmem:[#allocation5 + $0xf8] sm:$0xff]
    %v86 = vld [vmem:[#allocation7] sm:$0xff]
    %87 = vmatprep.subr.mxu0 0.0
    %88 = vmatpush1.msra.mxu0 %v54
    %89 = vmatprep.subr.mxu0 0.0
    %90 = vmatpush1.msra.mxu0 %v55
    %91 = vmatprep.subr.mxu0 0.0
    %92 = vmatpush1.msra.mxu0 %v56
    %93 = vmatprep.subr.mxu0 0.0
    %94 = vmatpush1.msra.mxu0 %v57
    %95 = vmatprep.subr.mxu0 0.0
    %96 = vmatpush1.msra.mxu0 %v58
    %97 = vmatprep.subr.mxu0 0.0
    %98 = vmatpush1.msra.mxu0 %v59
    %99 = vmatprep.subr.mxu0 0.0
    %100 = vmatpush1.msra.mxu0 %v60
    %101 = vmatprep.subr.mxu0 0.0
    %102 = vmatpush1.msra.mxu0 %v61
    %103 = vmatprep.subr.mxu0 0.0
    %104 = vmatpush1.msra.mxu0 %v62
    %105 = vmatprep.subr.mxu0 0.0
    %106 = vmatpush1.msra.mxu0 %v63
    %107 = vmatprep.subr.mxu0 0.0
    %108 = vmatpush1.msra.mxu0 %v64
    %109 = vmatprep.subr.mxu0 0.0
    %110 = vmatpush1.msra.mxu0 %v65
    %111 = vmatprep.subr.mxu0 0.0
    %112 = vmatpush1.msra.mxu0 %v66
    %113 = vmatprep.subr.mxu0 0.0
    %114 = vmatpush1.msra.mxu0 %v67
    %115 = vmatprep.subr.mxu0 0.0
    %116 = vmatpush1.msra.mxu0 %v68
    %117 = vmatprep.subr.mxu0 0.0
    %118 = vmatpush1.msra.mxu0 %v69
    %119 = vmatprep.subr.mxu0 0.0
    %120 = vmatpush1.msra.mxu0 %v70
    %121 = vmatprep.subr.mxu0 0.0
    %122 = vmatpush1.msra.mxu0 %v71
    %123 = vmatprep.subr.mxu0 0.0
    %124 = vmatpush1.msra.mxu0 %v72
    %125 = vmatprep.subr.mxu0 0.0
    %126 = vmatpush1.msra.mxu0 %v73
    %127 = vmatprep.subr.mxu0 0.0
    %128 = vmatpush1.msra.mxu0 %v74
    %129 = vmatprep.subr.mxu0 0.0
    %130 = vmatpush1.msra.mxu0 %v75
    %131 = vmatprep.subr.mxu0 0.0
    %132 = vmatpush1.msra.mxu0 %v76
    %133 = vmatprep.subr.mxu0 0.0
    %134 = vmatpush1.msra.mxu0 %v77
    %135 = vmatprep.subr.mxu0 0.0
    %136 = vmatpush1.msra.mxu0 %v78
    %137 = vmatprep.subr.mxu0 0.0
    %138 = vmatpush1.msra.mxu0 %v79
    %139 = vmatprep.subr.mxu0 0.0
    %140 = vmatpush1.msra.mxu0 %v80
    %141 = vmatprep.subr.mxu0 0.0
    %142 = vmatpush1.msra.mxu0 %v81
    %143 = vmatprep.subr.mxu0 0.0
    %144 = vmatpush1.msra.mxu0 %v82
    %145 = vmatprep.subr.mxu0 0.0
    %146 = vmatpush1.msra.mxu0 %v83
    %147 = vmatprep.subr.mxu0 0.0
    %148 = vmatpush1.msra.mxu0 %v84
    %149 = vmatprep.subr.mxu0 0.0
    %150 = vmatpush1.msra.mxu0 %v85
    %151 = vmatprep.mubr.f32.mxu0 %v53
    %152 = vmatmul.mubr.f32.gmra.mrb[0].mxu0 %v52
    %v153 = vpop.f32.mrb[0].mxu0
    %v154 = vadd.f32 %v86, %v153
    %v155 = vpop.f32.mrb[0].mxu0
    %156 = vdwg.mxu0
    %v157 = vtanh.pop %v154
    %158 = vst [vmem:[#allocation8] sm:$0xff] %v157
    // Predicated region
    $region26: #{tpu_custom_call.1} parent=1 // pred_check
      _
    $region27: #{tpu_custom_call.1} parent=1 // pred_check_branch
      %160 = sbr.rel (0) target = $region29
    $region28: #{tpu_custom_call.1} parent=1 // pred_region
      %s162 = ssub.s32 128, 128
      %163 = vsyncadd [#allocation4], %s162
      %s165 = sshll.u32 [#allocation8], 4
      %s166 = int_to_ptr.vmem [resolvable:$true] %s165
      %168 = dma.vmem_to_hbm [thread:$0]  %s166, 128, %s3, [#allocation4]
    $region29: #{tpu_custom_call.1} parent=1 // pred_fallthru
      _
    // Predicated region
    $region30: #{tpu_custom_call.1} parent=1 // pred_check
      _
    $region31: #{tpu_custom_call.1} parent=1 // pred_check_branch
      %170 = sbr.rel (0) target = $region33
    $region32: #{tpu_custom_call.1} parent=1 // pred_region
      %171 = dma.done [#allocation4], 128
    $region33: #{tpu_custom_call.1} parent=1 // pred_fallthru
      _
    %172 = vsyncpa [#allocation3], 1
    %173 = vsyncpa [#allocation6], 1
    %174 = vsyncpa [#allocation4], 1

</llo_original>
